<compile_context>
chip_gen: v5e
topology: v5e:2x2
jax: 0.10.0
libtpu: 0.0.40
codegen_flags: <defaults>
</compile_context>

<pallas_src>
import functools

import jax
import jax.numpy as jnp
from jax import lax
from jax.experimental import pallas as pl
from jax.experimental.pallas import tpu as pltpu


def _round_up(a, b):
    return (a + b - 1) // b * b


def _ffwd_kernel(x_ref, w1_ref, b1_ref, w2_ref, b2_ref, o_ref, *, resident):
    """One (tm, Cp) row tile; hidden dim streamed in th chunks on grid axis 1.

    x_ref : (tm, Cp) input rows (any float dtype; cast to bf16 here)
    w1_ref: resident -> (nk, th, Cp) bf16 full W1 ; chunked -> (th, Cp) chunk k
    b1_ref: (1, th)  f32 chunk k
    w2_ref: same layout as w1_ref, holding W2^T (hidden units on rows)
    b2_ref: (1, Cp)  f32
    o_ref : (tm, Cp) f32 output block, resident across k (index_map ignores k)
    """
    k = pl.program_id(1)

    @pl.when(k == 0)
    def _():
        o_ref[...] = jnp.zeros_like(o_ref)

    xb = x_ref[...].astype(jnp.bfloat16)
    w1c = w1_ref[k] if resident else w1_ref[...]   # (th, Cp)
    w2c = w2_ref[k] if resident else w2_ref[...]   # (th, Cp)

    # h = x @ W1^T for this hidden chunk: contract the Cp axis of both operands.
    h = lax.dot_general(xb, w1c, (((1,), (1,)), ((), ())),
                        preferred_element_type=jnp.float32)
    h = jnp.maximum(h + b1_ref[...], 0.0)          # bias + ReLU in f32

    # Accumulate this chunk's contribution of h @ W2^T straight into the output.
    o_ref[...] = o_ref[...] + jnp.dot(h.astype(jnp.bfloat16), w2c,
                                      preferred_element_type=jnp.float32)

    @pl.when(k == pl.num_programs(1) - 1)
    def _():
        o_ref[...] = o_ref[...] + b2_ref[...]


def _vmem_budget_bytes():
    """Generation-aware scoped-VMEM budget (~80% of capacity, clamped)."""
    try:
        cap = pltpu.get_tpu_info().vmem_capacity_bytes
    except Exception:
        cap = 64 << 20   # conservative fallback: v7x per-TensorCore VMEM
    return max(32 << 20, min(int(cap * 0.8), 100 << 20))


def _choose_tiles(M, Cp, Hp, budget):
    """Pick (tm, th, weights_resident). Priority: resident > big tm > big th."""
    row_cap = max(8, _round_up(M, 8))

    def pick_th(target):
        th = min(target, Hp)
        th -= th % 128
        while Hp % th:
            th -= 128
        return th

    def footprint(tm, th, resident):
        b = 2 * 2 * tm * Cp * 4            # x + out row tiles, f32, double-buffered
        b += tm * th * 6                   # (tm, th) hidden intermediate (f32 + bf16)
        if resident:
            b += 2 * 2 * Hp * Cp * 2       # W1 + W2 fully resident, bf16 (2 bufs, worst case)
            b += 2 * th * Cp * 2           # possible materialized chunk copies
        else:
            b += 2 * 2 * th * Cp * 2       # W1 + W2 chunks, bf16, double-buffered
        b += (Hp + 2 * Cp) * 4 * 2         # biases
        return b + (4 << 20)               # compiler/internal scratch slack

    tm_cands = [1024, 768, 512, 256, 128, 64, 32, 16, 8]
    th_cands = [2048, 1024, 512, 256, 128]

    for resident in (True, False):
        # Don't shrink the row tile below 256 just to keep weights resident.
        tm_floor = min(256, row_cap) if resident else 8
        for tm_t in tm_cands:
            tm = min(tm_t, row_cap)
            if tm < tm_floor:
                break
            for th_t in th_cands:
                th = pick_th(th_t)
                if footprint(tm, th, resident) <= budget:
                    return tm, th, resident
    return min(128, row_cap), 128, False


def prepare_ffwd_params(w1, b1, w2, b2):
    """Pad + cast the weights ONCE (do not call per forward pass).

    w1: (H, C) = torch ffwd[0].weight    b1: (H,)
    w2: (C, H) = torch ffwd[2].weight    b2: (C,)
    """
    H, C = w1.shape
    assert w2.shape == (C, H) and b1.shape == (H,) and b2.shape == (C,)
    Cp = _round_up(C, 128)
    Hp = _round_up(H, 128)
    # Zero padding is exact: padded x cols hit zero W1 cols, padded hidden rows
    # have zero bias (ReLU(0)=0) and zero W2 rows, padded output cols get zero
    # W2 cols + zero bias and are sliced off in feed_forward().
    w1p = jnp.pad(w1, ((0, Hp - H), (0, Cp - C))).astype(jnp.bfloat16)     # (Hp, Cp)
    w2p = jnp.pad(w2.T, ((0, Hp - H), (0, Cp - C))).astype(jnp.bfloat16)   # (Hp, Cp)
    b1p = jnp.pad(b1, (0, Hp - H)).reshape(1, Hp).astype(jnp.float32)
    b2p = jnp.pad(b2, (0, Cp - C)).reshape(1, Cp).astype(jnp.float32)
    return dict(w1=w1p, b1=b1p, w2=w2p, b2=b2p, C=C, H=H)


def feed_forward(x, params):
    """x: (..., C) float. Returns same shape. Dropout = identity (eval mode)."""
    w1p, b1p, w2p, b2p = params["w1"], params["b1"], params["w2"], params["b2"]
    C = params["C"]
    Hp, Cp = w1p.shape
    lead = x.shape[:-1]
    assert x.shape[-1] == C
    M = 1
    for d in lead:
        M *= d

    budget = _vmem_budget_bytes()
    tm, th, resident = _choose_tiles(M, Cp, Hp, budget)

    # Prefer >= 2 row tiles when M is large enough so the "parallel" M axis can
    # be split across TensorCores (v7x megacore); tiny M keeps a single tile.
    if M >= 512 and _round_up(M, tm) == tm:
        tm = _round_up((M + 1) // 2, 8)

    Mp = _round_up(M, tm)
    nk = Hp // th

    x2 = x.reshape(M, C)
    if (Mp, Cp) != (M, C):
        x2 = jnp.pad(x2, ((0, Mp - M), (0, Cp - C)))   # keep dtype; cast in kernel

    if resident:
        # Whole weights live in VMEM; constant index_map -> DMA'd once total.
        w1_in = w1p.reshape(nk, th, Cp)
        w2_in = w2p.reshape(nk, th, Cp)
        w1_spec = pl.BlockSpec((nk, th, Cp), lambda i, k: (0, 0, 0))
        w2_spec = pl.BlockSpec((nk, th, Cp), lambda i, k: (0, 0, 0))
    else:
        # Stream (th, Cp) chunks of each weight along the "arbitrary" k axis.
        w1_in, w2_in = w1p, w2p
        w1_spec = pl.BlockSpec((th, Cp), lambda i, k: (k, 0))
        w2_spec = pl.BlockSpec((th, Cp), lambda i, k: (k, 0))

    kernel = functools.partial(_ffwd_kernel, resident=resident)

    out2 = pl.pallas_call(
        kernel,
        out_shape=jax.ShapeDtypeStruct((Mp, Cp), jnp.float32),
        grid_spec=pltpu.PrefetchScalarGridSpec(
            num_scalar_prefetch=0,
            grid=(Mp // tm, nk),
            in_specs=[
                pl.BlockSpec((tm, Cp), lambda i, k: (i, 0)),   # x row tile
                w1_spec,
                pl.BlockSpec((1, th), lambda i, k: (0, k)),    # b1 chunk
                w2_spec,
                pl.BlockSpec((1, Cp), lambda i, k: (0, 0)),    # b2
            ],
            out_specs=pl.BlockSpec((tm, Cp), lambda i, k: (i, 0)),
        ),
        compiler_params=pltpu.CompilerParams(
            dimension_semantics=("parallel", "arbitrary"),
            vmem_limit_bytes=budget,
        ),
    )(x2, w1_in, b1p, w2_in, b2p)

    out = out2[:M, :C].reshape(lead + (C,))
    return out if x.dtype == jnp.float32 else out.astype(x.dtype)


def init_params(key, n_embd):
    """PyTorch nn.Linear default init + layouts: w1 (4C, C), w2 (C, 4C)."""
    hidden = 4 * n_embd
    k1, k2, k3, k4 = jax.random.split(key, 4)
    lim1 = 1.0 / jnp.sqrt(n_embd)    # fan_in of layer 1
    lim2 = 1.0 / jnp.sqrt(hidden)    # fan_in of layer 2
    w1 = jax.random.uniform(k1, (hidden, n_embd), jnp.float32, -lim1, lim1)
    b1 = jax.random.uniform(k2, (hidden,), jnp.float32, -lim1, lim1)
    w2 = jax.random.uniform(k3, (n_embd, hidden), jnp.float32, -lim2, lim2)
    b2 = jax.random.uniform(k4, (n_embd,), jnp.float32, -lim2, lim2)
    return w1, b1, w2, b2


if __name__ == "__main__":
    key = jax.random.PRNGKey(0)
    B, T, n_embd = 2, 8, 32            # hidden = 4 * n_embd = 128
    kx, kp = jax.random.split(key)

    x = jax.random.normal(kx, (B, T, n_embd), jnp.float32)
    w1, b1, w2, b2 = init_params(kp, n_embd)
    params = prepare_ffwd_params(w1, b1, w2, b2)   # pad + bf16-cast once

    out = feed_forward(x, params)
    out = jax.block_until_ready(out)

    # Pure-JAX f32 reference; kernel matmuls run in bf16 -> loose tolerance.
    x2d = x.reshape(-1, n_embd)
    ref = (jnp.maximum(x2d @ w1.T + b1, 0.0) @ w2.T + b2).reshape(B, T, n_embd)
    assert out.shape == (B, T, n_embd)
    max_err = float(jnp.max(jnp.abs(out - ref)))
    assert jnp.allclose(out, ref, atol=5e-2, rtol=5e-2), f"max_err={max_err}"

    print("KERNEL_OK")
</pallas_src>

<mosaic_0001>
module attributes {stable_mosaic.version = 11 : i64} {
  func.func @_ffwd_kernel(%arg0: i32, %arg1: i32, %arg2: memref<16x128xf32, #tpu.memory_space<vmem>>, %arg3: memref<1x128x128xbf16, #tpu.memory_space<vmem>>, %arg4: memref<1x128xf32, #tpu.memory_space<vmem>>, %arg5: memref<1x128x128xbf16, #tpu.memory_space<vmem>>, %arg6: memref<1x128xf32, #tpu.memory_space<vmem>>, %arg7: memref<16x128xf32, #tpu.memory_space<vmem>>) attributes {dimension_semantics = [#tpu.dimension_semantics<parallel>, #tpu.dimension_semantics<arbitrary>], iteration_bounds = array<i64: 1, 1>, scalar_prefetch = 0 : i64, scratch_operands = 0 : i64, tpu.core_type = #tpu.core_type<tc>, window_params = [{transform_indices = @transform_0, window_bounds = array<i64: 16, 128>}, {pipeline_mode = #tpu.pipeline_mode<synchronous>, transform_indices = @transform_1, window_bounds = array<i64: 1, 128, 128>}, {transform_indices = @transform_2, window_bounds = array<i64: 1, 128>}, {pipeline_mode = #tpu.pipeline_mode<synchronous>, transform_indices = @transform_3, window_bounds = array<i64: 1, 128, 128>}, {pipeline_mode = #tpu.pipeline_mode<synchronous>, transform_indices = @transform_4, window_bounds = array<i64: 1, 128>}, {transform_indices = @transform_5, window_bounds = array<i64: 16, 128>}]} {
    %c0_i32 = arith.constant 0 : i32
    %0 = arith.cmpi eq, %arg1, %c0_i32 : i32
    %1 = arith.extui %0 : i1 to i32
    %c0_i32_0 = arith.constant 0 : i32
    %2 = arith.cmpi ne, %1, %c0_i32_0 : i32
    scf.if %2 {
      %cst_16 = arith.constant 0.000000e+00 : f32
      %25 = vector.broadcast %cst_16 : f32 to vector<16x128xf32>
      %c0_17 = arith.constant 0 : index
      %c0_18 = arith.constant 0 : index
      %26 = vector.load %arg7[%c0_17, %c0_18] : memref<16x128xf32, #tpu.memory_space<vmem>>, vector<16x128xf32>
      tpu.vector_store %arg7[%c0_17, %c0_18], %25 {strides = array<i32>} : memref<16x128xf32, #tpu.memory_space<vmem>>, vector<16x128xf32>,
    } else {
    }
    %c0 = arith.constant 0 : index
    %c0_1 = arith.constant 0 : index
    %3 = vector.load %arg2[%c0, %c0_1] : memref<16x128xf32, #tpu.memory_space<vmem>>, vector<16x128xf32>
    %4 = arith.truncf %3 : vector<16x128xf32> to vector<16x128xbf16>
    %5 = arith.index_cast %arg1 : i32 to index
    %c0_2 = arith.constant 0 : index
    %c0_3 = arith.constant 0 : index
    %6 = vector.load %arg3[%5, %c0_2, %c0_3] : memref<1x128x128xbf16, #tpu.memory_space<vmem>>, vector<1x128x128xbf16>
    %7 = vector.shape_cast %6 : vector<1x128x128xbf16> to vector<128x128xbf16>
    %8 = arith.index_cast %arg1 : i32 to index
    %c0_4 = arith.constant 0 : index
    %c0_5 = arith.constant 0 : index
    %9 = vector.load %arg5[%8, %c0_4, %c0_5] : memref<1x128x128xbf16, #tpu.memory_space<vmem>>, vector<1x128x128xbf16>
    %10 = vector.shape_cast %9 : vector<1x128x128xbf16> to vector<128x128xbf16>
    %cst = arith.constant dense<0.000000e+00> : vector<16x128xf32>
    %11 = tpu.matmul %4, %7, %cst {dimension_numbers = #tpu.dot_dimension_numbers<[1], [1], [0], [0], [0, 0, 1, 0], [], []>} : vector<16x128xbf16>, vector<128x128xbf16>, vector<16x128xf32> -> vector<16x128xf32>
    %c0_6 = arith.constant 0 : index
    %c0_7 = arith.constant 0 : index
    %12 = vector.load %arg4[%c0_6, %c0_7] : memref<1x128xf32, #tpu.memory_space<vmem>>, vector<1x128xf32>
    %13 = vector.broadcast %12 : vector<1x128xf32> to vector<16x128xf32>
    %14 = arith.addf %11, %13 : vector<16x128xf32>
    %cst_8 = arith.constant 0.000000e+00 : f32
    %15 = vector.broadcast %cst_8 : f32 to vector<16x128xf32>
    %16 = arith.maximumf %14, %15 : vector<16x128xf32>
    %c0_9 = arith.constant 0 : index
    %c0_10 = arith.constant 0 : index
    %17 = vector.load %arg7[%c0_9, %c0_10] : memref<16x128xf32, #tpu.memory_space<vmem>>, vector<16x128xf32>
    %18 = arith.truncf %16 : vector<16x128xf32> to vector<16x128xbf16>
    %cst_11 = arith.constant dense<0.000000e+00> : vector<16x128xf32>
    %19 = tpu.matmul %18, %10, %cst_11 {dimension_numbers = #tpu.dot_dimension_numbers<[1], [0], [0], [1], [0, 0, 1, 1], [], []>} : vector<16x128xbf16>, vector<128x128xbf16>, vector<16x128xf32> -> vector<16x128xf32>
    %20 = arith.addf %17, %19 : vector<16x128xf32>
    %c0_12 = arith.constant 0 : index
    %c0_13 = arith.constant 0 : index
    %21 = vector.load %arg7[%c0_12, %c0_13] : memref<16x128xf32, #tpu.memory_space<vmem>>, vector<16x128xf32>
    tpu.vector_store %arg7[%c0_12, %c0_13], %20 {strides = array<i32>} : memref<16x128xf32, #tpu.memory_space<vmem>>, vector<16x128xf32>,
    %c0_i32_14 = arith.constant 0 : i32
    %22 = arith.cmpi eq, %arg1, %c0_i32_14 : i32
    %23 = arith.extui %22 : i1 to i32
    %c0_i32_15 = arith.constant 0 : i32
    %24 = arith.cmpi ne, %23, %c0_i32_15 : i32
    scf.if %24 {
      %c0_16 = arith.constant 0 : index
      %c0_17 = arith.constant 0 : index
      %25 = vector.load %arg7[%c0_16, %c0_17] : memref<16x128xf32, #tpu.memory_space<vmem>>, vector<16x128xf32>
      %c0_18 = arith.constant 0 : index
      %c0_19 = arith.constant 0 : index
      %26 = vector.load %arg6[%c0_18, %c0_19] : memref<1x128xf32, #tpu.memory_space<vmem>>, vector<1x128xf32>
      %27 = vector.broadcast %26 : vector<1x128xf32> to vector<16x128xf32>
      %28 = arith.addf %25, %27 : vector<16x128xf32>
      %c0_20 = arith.constant 0 : index
      %c0_21 = arith.constant 0 : index
      %29 = vector.load %arg7[%c0_20, %c0_21] : memref<16x128xf32, #tpu.memory_space<vmem>>, vector<16x128xf32>
      tpu.vector_store %arg7[%c0_20, %c0_21], %28 {strides = array<i32>} : memref<16x128xf32, #tpu.memory_space<vmem>>, vector<16x128xf32>,
    } else {
    }
    return
  }
  func.func @transform_0(%arg0: i32, %arg1: i32) -> (i32, i32) {
    %c0_i32 = arith.constant 0 : i32
    %c0_i32_0 = arith.constant 0 : i32
    return %arg0, %c0_i32 : i32, i32
  }
  func.func @transform_1(%arg0: i32, %arg1: i32) -> (i32, i32, i32) {
    %c0_i32 = arith.constant 0 : i32
    %c0_i32_0 = arith.constant 0 : i32
    %c0_i32_1 = arith.constant 0 : i32
    %c0_i32_2 = arith.constant 0 : i32
    return %c0_i32, %c0_i32_0, %c0_i32_1 : i32, i32, i32
  }
  func.func @transform_2(%arg0: i32, %arg1: i32) -> (i32, i32) {
    %c0_i32 = arith.constant 0 : i32
    %c0_i32_0 = arith.constant 0 : i32
    return %c0_i32, %arg1 : i32, i32
  }
  func.func @transform_3(%arg0: i32, %arg1: i32) -> (i32, i32, i32) {
    %c0_i32 = arith.constant 0 : i32
    %c0_i32_0 = arith.constant 0 : i32
    %c0_i32_1 = arith.constant 0 : i32
    %c0_i32_2 = arith.constant 0 : i32
    return %c0_i32, %c0_i32_0, %c0_i32_1 : i32, i32, i32
  }
  func.func @transform_4(%arg0: i32, %arg1: i32) -> (i32, i32) {
    %c0_i32 = arith.constant 0 : i32
    %c0_i32_0 = arith.constant 0 : i32
    %c0_i32_1 = arith.constant 0 : i32
    return %c0_i32, %c0_i32_0 : i32, i32
  }
  func.func @transform_5(%arg0: i32, %arg1: i32) -> (i32, i32) {
    %c0_i32 = arith.constant 0 : i32
    %c0_i32_0 = arith.constant 0 : i32
    return %arg0, %c0_i32 : i32, i32
  }
}

</mosaic_0001>

<llo_original>
// kernel: tpu_custom_call.1
$region0: #{tpu_custom_call.1}
  #allocation0 [shape = 'u32[]', space=smem, size = 0x4, offset = 0x4, fixed_abs, tag = 'smem constant byte address 0x4 - core index']
  #allocation1 [shape = 'u32[72,128]{1,0:T(1,128)}', space=vmem, size = 0x9000, scoped, tag = 'internal scratch']
  %s0 = inlined_call_operand.hbm [shape: f32[16,128], index: 0, kind: input, shape index: {}]
  %s1 = inlined_call_operand.hbm [shape: bf16[1,128,128], index: 1, kind: input, shape index: {}]
  %s2 = inlined_call_operand.vmem [shape: f32[1,128], index: 2, kind: input, shape index: {}]
  %s3 = inlined_call_operand.hbm [shape: bf16[1,128,128], index: 3, kind: input, shape index: {}]
  %s4 = inlined_call_operand.vmem [shape: f32[1,128], index: 4, kind: input, shape index: {}]
  %s5 = inlined_call_operand.hbm [shape: f32[16,128], index: 5, kind: output, shape index: {}]
  %s6 = sld [smem:[#allocation0]]
  $region50: #{tpu_custom_call.1} parent=0
    _
  %s8 = ssub.s32 1, %s6
  %s9 = scalar_select 0, %s8, %s6
  $region1: #{tpu_custom_call.1} parent=0
    #allocation2 [shape = 'u8[8192]{0}', space=vmem, size = 0x2000, scoped, tag = 'input window, operand 0, single buffered']
    #allocation3 [shape = 's32[1]{0}', space=sflag, size = 0x4, scoped, tag = 'scoped memory for tpu_custom_call.1']
    #allocation4 [shape = 's32[1]{0}', space=sflag, size = 0x4, scoped, tag = 'scoped memory for tpu_custom_call.1']
    #allocation5 [shape = 'u8[32768]{0}', space=vmem, size = 0x8000, scoped, tag = 'input window, operand 1, single buffered']
    #allocation6 [shape = 's32[1]{0}', space=sflag, size = 0x4, scoped, tag = 'scoped memory for tpu_custom_call.1']
    #allocation7 [shape = 'u8[32768]{0}', space=vmem, size = 0x8000, scoped, tag = 'input window, operand 3, single buffered']
    #allocation8 [shape = 'u8[8192]{0}', space=vmem, size = 0x2000, scoped, tag = 'output window, operand 0, single buffered']
    %10 = vsyncpa [#allocation3], 0
    %11 = vsyncpa [#allocation6], 0
    %12 = vsyncpa [#allocation4], 0
    // Predicated region
    $region2: #{tpu_custom_call.1} parent=1 // pred_check
      _
    $region3: #{tpu_custom_call.1} parent=1 // pred_check_branch
      %14 = sbr.rel (0) target = $region5
    $region4: #{tpu_custom_call.1} parent=1 // pred_region
      %16 = vsyncadd [#allocation3], 0
      %s17 = sshll.u32 %s0, 4
      %s18 = int_to_ptr.hbm [resolvable:$true] %s17
      %s19 = sshll.u32 [#allocation2], 4
      %s20 = int_to_ptr.vmem [resolvable:$true] %s19
      %25 = dma.hbm_to_vmem [thread:$0]  %s18, 256, %s20, [#allocation3], 128, 128, 8
    $region5: #{tpu_custom_call.1} parent=1 // pred_fallthru
      _
    // Predicated region
    $region6: #{tpu_custom_call.1} parent=1 // pred_check
      _
    $region7: #{tpu_custom_call.1} parent=1 // pred_check_branch
      %27 = sbr.rel (0) target = $region9
    $region8: #{tpu_custom_call.1} parent=1 // pred_region
      %29 = vsyncadd [#allocation6], 0
      %s30 = sshll.u32 %s1, 4
      %s31 = int_to_ptr.hbm [resolvable:$true] %s30
      %s32 = sshll.u32 [#allocation5], 4
      %s33 = int_to_ptr.vmem [resolvable:$true] %s32
      %38 = dma.hbm_to_vmem [thread:$0]  %s31, 1024, %s33, [#allocation6], 64, 64, 4
    $region9: #{tpu_custom_call.1} parent=1 // pred_fallthru
      _
    // Predicated region
    $region10: #{tpu_custom_call.1} parent=1 // pred_check
      _
    $region11: #{tpu_custom_call.1} parent=1 // pred_check_branch
      %40 = sbr.rel (0) target = $region13
    $region12: #{tpu_custom_call.1} parent=1 // pred_region
      _
    $region13: #{tpu_custom_call.1} parent=1 // pred_fallthru
      _
    // Predicated region
    $region14: #{tpu_custom_call.1} parent=1 // pred_check
      _
    $region15: #{tpu_custom_call.1} parent=1 // pred_check_branch
      %42 = sbr.rel (0) target = $region17
    $region16: #{tpu_custom_call.1} parent=1 // pred_region
      %44 = vsyncadd [#allocation6], 0
      %s45 = sshll.u32 %s3, 4
      %s46 = int_to_ptr.hbm [resolvable:$true] %s45
      %s47 = sshll.u32 [#allocation7], 4
      %s48 = int_to_ptr.vmem [resolvable:$true] %s47
      %53 = dma.hbm_to_vmem [thread:$0]  %s46, 1024, %s48, [#allocation6], 64, 64, 4
    $region17: #{tpu_custom_call.1} parent=1 // pred_fallthru
      _
    // Predicated region
    $region18: #{tpu_custom_call.1} parent=1 // pred_check
      _
    $region19: #{tpu_custom_call.1} parent=1 // pred_check_branch
      %55 = sbr.rel (0) target = $region21
    $region20: #{tpu_custom_call.1} parent=1 // pred_region
      _
    $region21: #{tpu_custom_call.1} parent=1 // pred_fallthru
      _
    // Predicated region
    $region22: #{tpu_custom_call.1} parent=1 // pred_check
      _
    $region23: #{tpu_custom_call.1} parent=1 // pred_check_branch
      %57 = sbr.rel (0) target = $region25
    $region24: #{tpu_custom_call.1} parent=1 // pred_region
      %59 = dma.done [#allocation3], 256
    $region25: #{tpu_custom_call.1} parent=1 // pred_fallthru
      _
    // Predicated region
    $region26: #{tpu_custom_call.1} parent=1 // pred_check
      _
    $region27: #{tpu_custom_call.1} parent=1 // pred_check_branch
      %61 = sbr.rel (0) target = $region29
    $region28: #{tpu_custom_call.1} parent=1 // pred_region
      %63 = dma.done [#allocation6], 1024
    $region29: #{tpu_custom_call.1} parent=1 // pred_fallthru
      _
    // Predicated region
    $region30: #{tpu_custom_call.1} parent=1 // pred_check
      _
    $region31: #{tpu_custom_call.1} parent=1 // pred_check_branch
      %65 = sbr.rel (0) target = $region33
    $region32: #{tpu_custom_call.1} parent=1 // pred_region
      %67 = dma.done [#allocation6], 1024
    $region33: #{tpu_custom_call.1} parent=1 // pred_fallthru
      _
    %p68 = scmp.eq.s32.totalorder 0, 0
    // Predicated region
    $region34: #{tpu_custom_call.1} parent=1 // pred_check
      %p69 = pneg %p68
    $region35: #{tpu_custom_call.1} parent=1 // pred_check_branch
      %71 = sbr.rel (%p69) target = $region37
    $region36: #{tpu_custom_call.1} parent=1 // pred_region
      %72 = vst [vmem:[#allocation8] sm:$0xff] 0.0
      %73 = vst [vmem:[#allocation8 + $0x8] sm:$0xff] 0.0
    $region37: #{tpu_custom_call.1} parent=1 // pred_fallthru
      _
    %v74 = vld [vmem:[#allocation2] sm:$0xff]
    %v75 = vld [vmem:[#allocation2 + $0x8] sm:$0xff]
    %v76 = vpack.c.bf16 %v75, %v74
    %s77 = smul.u32 0, 16
    %s78 = smul.addr %s77, 4
    %s79 = scalar_lea.vmem [#allocation5], %s78
    %v80 = vld [vmem:[%s79] sm:$0xf]
    %v81 = vld [vmem:[%s79 + $0x4] sm:$0xf]
    %v82 = vld [vmem:[%s79 + $0x8] sm:$0xf]
    %v83 = vld [vmem:[%s79 + $0xc] sm:$0xf]
    %v84 = vld [vmem:[%s79 + $0x10] sm:$0xf]
    %v85 = vld [vmem:[%s79 + $0x14] sm:$0xf]
    %v86 = vld [vmem:[%s79 + $0x18] sm:$0xf]
    %v87 = vld [vmem:[%s79 + $0x1c] sm:$0xf]
    %v88 = vld [vmem:[%s79 + $0x20] sm:$0xf]
    %v89 = vld [vmem:[%s79 + $0x24] sm:$0xf]
    %v90 = vld [vmem:[%s79 + $0x28] sm:$0xf]
    %v91 = vld [vmem:[%s79 + $0x2c] sm:$0xf]
    %v92 = vld [vmem:[%s79 + $0x30] sm:$0xf]
    %v93 = vld [vmem:[%s79 + $0x34] sm:$0xf]
    %v94 = vld [vmem:[%s79 + $0x38] sm:$0xf]
    %v95 = vld [vmem:[%s79 + $0x3c] sm:$0xf]
    %s96 = smul.addr %s77, 4
    %s97 = scalar_lea.vmem [#allocation7], %s96
    %v98 = vld [vmem:[%s97] sm:$0xf]
    %v99 = vld [vmem:[%s97 + $0x4] sm:$0xf]
    %v100 = vld [vmem:[%s97 + $0x8] sm:$0xf]
    %v101 = vld [vmem:[%s97 + $0xc] sm:$0xf]
    %v102 = vld [vmem:[%s97 + $0x10] sm:$0xf]
    %v103 = vld [vmem:[%s97 + $0x14] sm:$0xf]
    %v104 = vld [vmem:[%s97 + $0x18] sm:$0xf]
    %v105 = vld [vmem:[%s97 + $0x1c] sm:$0xf]
    %v106 = vld [vmem:[%s97 + $0x20] sm:$0xf]
    %v107 = vld [vmem:[%s97 + $0x24] sm:$0xf]
    %v108 = vld [vmem:[%s97 + $0x28] sm:$0xf]
    %v109 = vld [vmem:[%s97 + $0x2c] sm:$0xf]
    %v110 = vld [vmem:[%s97 + $0x30] sm:$0xf]
    %v111 = vld [vmem:[%s97 + $0x34] sm:$0xf]
    %v112 = vld [vmem:[%s97 + $0x38] sm:$0xf]
    %v113 = vld [vmem:[%s97 + $0x3c] sm:$0xf]
    %v114 = vld [vmem:[%s2] sm:$0x1]
    %v116 = vperm.slane %v114, 0
    %v134 = vunpack.c.l.b16 %v80
    %v135 = vunpack.c.l.b16 %v81
    %v136 = vunpack.c.l.b16 %v82
    %v137 = vunpack.c.l.b16 %v83
    %v138 = vunpack.c.l.b16 %v84
    %v139 = vunpack.c.l.b16 %v85
    %v140 = vunpack.c.l.b16 %v86
    %v141 = vunpack.c.l.b16 %v87
    %v142 = vunpack.c.l.b16 %v88
    %v143 = vunpack.c.l.b16 %v89
    %v144 = vunpack.c.l.b16 %v90
    %v145 = vunpack.c.l.b16 %v91
    %v146 = vunpack.c.l.b16 %v92
    %v147 = vunpack.c.l.b16 %v93
    %v148 = vunpack.c.l.b16 %v94
    %v149 = vunpack.c.l.b16 %v95
    %v150 = vpack.c.b16 %v135, %v134
    %v151 = vpack.c.b16 %v137, %v136
    %v152 = vpack.c.b16 %v139, %v138
    %v153 = vpack.c.b16 %v141, %v140
    %v154 = vpack.c.b16 %v143, %v142
    %v155 = vpack.c.b16 %v145, %v144
    %v156 = vpack.c.b16 %v147, %v146
    %v157 = vpack.c.b16 %v149, %v148
    %166 = vmatpush.bf16.xpose.msra.mxu0 %v157
    %167 = vmatpush.bf16.xpose.msra.mxu0 %v156
    %168 = vmatpush.bf16.xpose.msra.mxu0 %v155
    %169 = vmatpush.bf16.xpose.msra.mxu0 %v154
    %170 = vmatpush.bf16.xpose.msra.mxu0 %v153
    %171 = vmatpush.bf16.xpose.msra.mxu0 %v152
    %172 = vmatpush.bf16.xpose.msra.mxu0 %v151
    %173 = vmatpush.bf16.xpose.msra.mxu0 %v150
    %174 = vmatmul.bf16.gmra.mxu0 %v76
    %v175 = vpop.f32.mrf.mxu0
    %v176 = vadd.f32 %v116, %v175
    %v177 = vpop.f32.mrf.mxu0
    %v178 = vadd.f32 %v116, %v177
    %179 = vdwg.mxu0
    %v180 = vmax.f32 %v176, 0.0
    %v181 = vmax.f32 %v178, 0.0
    %v182 = vld [vmem:[#allocation8] sm:$0xff]
    %v183 = vld [vmem:[#allocation8 + $0x8] sm:$0xff]
    %v184 = vpack.c.bf16 %v181, %v180
    %v201 = vunpack.c.l.b16 %v98
    %v202 = vunpack.c.l.b16 %v99
    %v203 = vunpack.c.l.b16 %v100
    %v204 = vunpack.c.l.b16 %v101
    %v205 = vunpack.c.l.b16 %v102
    %v206 = vunpack.c.l.b16 %v103
    %v207 = vunpack.c.l.b16 %v104
    %v208 = vunpack.c.l.b16 %v105
    %v209 = vunpack.c.l.b16 %v106
    %v210 = vunpack.c.l.b16 %v107
    %v211 = vunpack.c.l.b16 %v108
    %v212 = vunpack.c.l.b16 %v109
    %v213 = vunpack.c.l.b16 %v110
    %v214 = vunpack.c.l.b16 %v111
    %v215 = vunpack.c.l.b16 %v112
    %v216 = vunpack.c.l.b16 %v113
    %v217 = vpack.c.b16 %v202, %v201
    %v218 = vpack.c.b16 %v204, %v203
    %v219 = vpack.c.b16 %v206, %v205
    %v220 = vpack.c.b16 %v208, %v207
    %v221 = vpack.c.b16 %v210, %v209
    %v222 = vpack.c.b16 %v212, %v211
    %v223 = vpack.c.b16 %v214, %v213
    %v224 = vpack.c.b16 %v216, %v215
    %233 = vmatpush.bf16.msra.mxu0 %v224
    %234 = vmatpush.bf16.msra.mxu0 %v223
    %235 = vmatpush.bf16.msra.mxu0 %v222
    %236 = vmatpush.bf16.msra.mxu0 %v221
    %237 = vmatpush.bf16.msra.mxu0 %v220
    %238 = vmatpush.bf16.msra.mxu0 %v219
    %239 = vmatpush.bf16.msra.mxu0 %v218
    %240 = vmatpush.bf16.msra.mxu0 %v217
    %241 = vmatmul.bf16.gmra.mxu0 %v184
    %v242 = vpop.f32.mrf.mxu0
    %v243 = vadd.f32 0.0, %v242
    %v244 = vpop.f32.mrf.mxu0
    %v245 = vadd.f32 0.0, %v244
    %246 = vdwg.mxu0
    %v247 = vadd.f32 %v182, %v243
    %v248 = vadd.f32 %v183, %v245
    %249 = vst [vmem:[#allocation8] sm:$0xff] %v247
    %250 = vst [vmem:[#allocation8 + $0x8] sm:$0xff] %v248
    // Predicated region
    $region38: #{tpu_custom_call.1} parent=1 // pred_check
      %p251 = pneg %p68
    $region39: #{tpu_custom_call.1} parent=1 // pred_check_branch
      %253 = sbr.rel (%p251) target = $region41
    $region40: #{tpu_custom_call.1} parent=1 // pred_region
      %v254 = vld [vmem:[#allocation8] sm:$0xff]
      %v255 = vld [vmem:[#allocation8 + $0x8] sm:$0xff]
      %v256 = vld [vmem:[%s4] sm:$0x1]
      %v258 = vperm.slane %v256, 0
      %v260 = vadd.f32 %v254, %v258
      %v261 = vadd.f32 %v255, %v258
      %262 = vst [vmem:[#allocation8] sm:$0xff] %v260
      %263 = vst [vmem:[#allocation8 + $0x8] sm:$0xff] %v261
    $region41: #{tpu_custom_call.1} parent=1 // pred_fallthru
      _
    // Predicated region
    $region42: #{tpu_custom_call.1} parent=1 // pred_check
      _
    $region43: #{tpu_custom_call.1} parent=1 // pred_check_branch
      %265 = sbr.rel (0) target = $region45
    $region44: #{tpu_custom_call.1} parent=1 // pred_region
      %267 = vsyncadd [#allocation4], 0
      %s268 = sshll.u32 [#allocation8], 4
      %s269 = int_to_ptr.vmem [resolvable:$true] %s268
      %s270 = sshll.u32 %s5, 4
      %s271 = int_to_ptr.hbm [resolvable:$true] %s270
      %276 = dma.vmem_to_hbm [thread:$0]  %s269, 256, %s271, [#allocation4], 128, 128, 8
    $region45: #{tpu_custom_call.1} parent=1 // pred_fallthru
      _
    // Predicated region
    $region46: #{tpu_custom_call.1} parent=1 // pred_check
      _
    $region47: #{tpu_custom_call.1} parent=1 // pred_check_branch
      %278 = sbr.rel (0) target = $region49
    $region48: #{tpu_custom_call.1} parent=1 // pred_region
      %280 = dma.done [#allocation4], 256
    $region49: #{tpu_custom_call.1} parent=1 // pred_fallthru
      _
    %281 = vsyncpa [#allocation3], 1
    %282 = vsyncpa [#allocation6], 1
    %283 = vsyncpa [#allocation4], 1

</llo_original>
